<compile_context>
chip_gen: v7x
topology: tpu7x:2x2x1
jax: 0.10.0
libtpu: 0.0.40
codegen_flags: <defaults>
</compile_context>

<pallas_src>
import functools

import jax
import jax.numpy as jnp
from jax import lax
from jax.experimental import pallas as pl
from jax.experimental.pallas import tpu as pltpu

LAMBDA_U = 0.01
LAMBDA_V = 0.01
LATENT = 5          # real latent size (module default)
L_PAD = 8           # stored latent size (sublane-friendly); padded dims stay 0
MOMENTUM = 0.8
LR = 0.001
ITERATIONS = 20     # module default is 1000; kept small for the demo


def _round_up(x, m):
    return ((x + m - 1) // m) * m


def _vmem_limit_bytes():
    """Scoped-VMEM budget derived from the actual part (64 MiB v7x vs 128 MiB)."""
    try:
        cap = pltpu.get_tpu_info().vmem_capacity_bytes
    except Exception:
        cap = 64 * 1024 * 1024          # conservative fallback (v7x per-TC VMEM)
    return min(int(cap * 0.85), 112 * 1024 * 1024)


def _pick_tile_n(nU_pad, num_items, tile_n_max, vmem_limit):
    """Largest item tile (multiple of 128) whose footprint fits the VMEM budget.

    Footprint per element of an (nU_pad, tile_n) tile: 2 B for the int8 R
    double-buffer plus ~20 B of f32/bf16 elementwise temporaries (upcast R,
    pred, masked err, square, bf16 copy); plus ~320 B per lane column for the
    double-buffered (L_PAD, tile_n) V/bufV tiles, plus small resident params.
    """
    # TODO(synk): for very large nU_pad add an inner user-chunk fori_loop so the
    # DMA tile can stay large while the live temporaries stay small.
    per_col = nU_pad * (2 + 20) + 320
    resident = 10 * L_PAD * max(nU_pad, 128) * 4 + 2 * 1024 * 1024
    budget = max(vmem_limit - resident, 4 * 1024 * 1024)
    tile_n = budget // per_col
    tile_n = min(int(tile_n), int(tile_n_max), _round_up(num_items, 128))
    return max(128, (tile_n // 128) * 128)


# ---------------------------------------------------------------------------
# Fused kernel: loss + gradients + SGD(momentum) update, grid over item tiles.
# All params are stored transposed: U^T (L_PAD, nU_pad), V^T (L_PAD, nI_pad).
# ---------------------------------------------------------------------------
def _fused_step_kernel(r_ref, ut_ref, but_ref, vt_ref, bvt_ref,
                       loss_ref, ut_out_ref, but_out_ref, vt_out_ref,
                       bvt_out_ref, gut_acc_ref, loss_acc_ref):
    j = pl.program_id(0)
    nj = pl.num_programs(0)

    @pl.when(j == 0)
    def _init():
        gut_acc_ref[...] = jnp.zeros_like(gut_acc_ref)
        loss_acc_ref[...] = jnp.zeros_like(loss_acc_ref)

    ut = ut_ref[...]                              # (L_PAD, nU_pad) f32, resident
    vtj = vt_ref[...]                             # (L_PAD, tile_n) f32, this item tile

    # predictions U @ V_j^T from the transposed storage: contract the latent
    # dim (dim 0 of both operands) -> (nU_pad, tile_n); f32 for accurate error.
    pred = lax.dot_general(ut, vtj, (((0,), (0,)), ((), ())),
                           preferred_element_type=jnp.float32)

    # int8 ratings -> f32 in-kernel; mask derived from R != 0 (never streamed).
    rj = r_ref[...].astype(jnp.float32)           # (nU_pad, tile_n)
    masked = jnp.where(rj != 0.0, rj - pred, 0.0)

    # data loss sum(I*err^2) == sum(masked^2); each V tile is visited exactly
    # once, so its lambda_V regularizer is folded in here as well.
    loss_acc_ref[...] += (jnp.sum(masked * masked, keepdims=True)
                          + LAMBDA_V * jnp.sum(vtj * vtj, keepdims=True))

    masked_bf = masked.astype(jnp.bfloat16)

    # gU^T partial: gUt[k,u] = sum_i V^T[k,i] * masked[u,i]   (A @ B^T form)
    gut_acc_ref[...] += lax.dot_general(
        vtj.astype(jnp.bfloat16), masked_bf, (((1,), (1,)), ((), ())),
        preferred_element_type=jnp.float32)

    # gV^T for this tile stays in its natural lane-dense (L_PAD, tile_n) layout.
    gvt = lax.dot_general(ut.astype(jnp.bfloat16), masked_bf,
                          (((1,), (0,)), ((), ())),
                          preferred_element_type=jnp.float32)
    gvt = -2.0 * gvt + 2.0 * LAMBDA_V * vtj

    # fused SGD w/ momentum for this V tile (PyTorch: buf = m*buf + g; p -= lr*buf)
    bvt_new = MOMENTUM * bvt_ref[...] + gvt
    bvt_out_ref[...] = bvt_new
    vt_out_ref[...] = vtj - LR * bvt_new          # full-lane vst, one tile per step

    @pl.when(j == nj - 1)
    def _finalize():
        # finish gU and update U / bufU (lane-dense (L_PAD, nU_pad) math)
        gut = -2.0 * gut_acc_ref[...] + 2.0 * LAMBDA_U * ut
        but_new = MOMENTUM * but_ref[...] + gut
        but_out_ref[...] = but_new
        ut_out_ref[...] = ut - LR * but_new
        # total loss uses the pre-update params, as in the reference
        loss_ref[...] = loss_acc_ref[...] + LAMBDA_U * jnp.sum(ut * ut, keepdims=True)


def _build_fused_step(nU_pad, nI_pad, tile_n, vmem_limit):
    num_tiles = nI_pad // tile_n
    return pl.pallas_call(
        _fused_step_kernel,
        grid=(num_tiles,),
        in_specs=[
            pl.BlockSpec((nU_pad, tile_n), lambda j: (0, j)),   # R (int8), streamed tiles
            pl.BlockSpec((L_PAD, nU_pad), lambda j: (0, 0)),    # U^T (resident)
            pl.BlockSpec((L_PAD, nU_pad), lambda j: (0, 0)),    # bufU^T (resident)
            pl.BlockSpec((L_PAD, tile_n), lambda j: (0, j)),    # V^T tile
            pl.BlockSpec((L_PAD, tile_n), lambda j: (0, j)),    # bufV^T tile
        ],
        out_specs=(
            pl.BlockSpec((1, 1), lambda j: (0, 0)),             # loss (final step only)
            pl.BlockSpec((L_PAD, nU_pad), lambda j: (0, 0)),    # U^T_new (resident)
            pl.BlockSpec((L_PAD, nU_pad), lambda j: (0, 0)),    # bufU^T_new (resident)
            pl.BlockSpec((L_PAD, tile_n), lambda j: (0, j)),    # V^T_new tile (lane-dense)
            pl.BlockSpec((L_PAD, tile_n), lambda j: (0, j)),    # bufV^T_new tile
        ),
        out_shape=(
            jax.ShapeDtypeStruct((1, 1), jnp.float32),
            jax.ShapeDtypeStruct((L_PAD, nU_pad), jnp.float32),
            jax.ShapeDtypeStruct((L_PAD, nU_pad), jnp.float32),
            jax.ShapeDtypeStruct((L_PAD, nI_pad), jnp.float32),
            jax.ShapeDtypeStruct((L_PAD, nI_pad), jnp.float32),
        ),
        scratch_shapes=[
            pltpu.VMEM((L_PAD, nU_pad), jnp.float32),           # gU^T accumulator
            pltpu.VMEM((1, 1), jnp.float32),                    # data-loss accumulator
        ],
        # in-place SGD: U^T->U^T_new, bufU^T->bufU^T_new, V^T->V^T_new, bufV^T->bufV^T_new
        input_output_aliases={1: 1, 2: 2, 3: 3, 4: 4},
        compiler_params=pltpu.CompilerParams(
            dimension_semantics=("arbitrary",),   # item axis carries gU/loss reductions
            vmem_limit_bytes=vmem_limit,          # derived from the actual part
        ),
    )


# ---------------------------------------------------------------------------
# Forward pass: build R (int8), init U/V, run the SGD+momentum training loop,
# return (U, V, sum(loss)/n_train, sum(valid_rmse)/n_train) like the module.
# ---------------------------------------------------------------------------
def pmf_forward(num_users, num_items, train_data, valid_data, key,
                iterations=ITERATIONS, tile_n_max=4096):
    n_train = train_data.shape[0]

    nU_pad = _round_up(num_users, 32)            # int8 sublane packing for R rows
    vmem_limit = _vmem_limit_bytes()
    tile_n = _pick_tile_n(nU_pad, num_items, tile_n_max, vmem_limit)
    num_tiles = int(pl.cdiv(num_items, tile_n))
    nI_pad = num_tiles * tile_n

    # Ratings matrix in int8 (ratings 1..5 are exact); the {0,1} indicator I is
    # derived in-kernel from R != 0, so it is never materialized / streamed.
    t_users = train_data[:, 0].astype(jnp.int32)
    t_items = train_data[:, 1].astype(jnp.int32)
    t_rates = train_data[:, 2].astype(jnp.int32)
    R_i8 = (jnp.zeros((nU_pad, nI_pad), jnp.int32)
            .at[t_users, t_items].set(t_rates)).astype(jnp.int8)

    # params (~torch.rand), stored transposed (L_PAD, n) -> lane-dense; padded
    # rows / latent dims start at 0 and provably stay 0 under SGD.
    kU, kV = jax.random.split(key)
    Ut0 = jnp.zeros((L_PAD, nU_pad), jnp.float32).at[:LATENT, :num_users].set(
        jax.random.uniform(kU, (LATENT, num_users), jnp.float32))
    Vt0 = jnp.zeros((L_PAD, nI_pad), jnp.float32).at[:LATENT, :num_items].set(
        jax.random.uniform(kV, (LATENT, num_items), jnp.float32))

    # validation indices / truth (tiny; gathered with plain XLA ops per step).
    # The reference casts the truth ratings to int before the RMSE.
    v_u = valid_data[:, 0].astype(jnp.int32)
    v_i = valid_data[:, 1].astype(jnp.int32)
    truth = valid_data[:, 2].astype(jnp.int32).astype(jnp.float32)

    fused_step = _build_fused_step(nU_pad, nI_pad, tile_n, vmem_limit)

    def step(carry, _):
        Ut, bUt, Vt, bVt = carry
        loss, Ut, bUt, Vt, bVt = fused_step(R_i8, Ut, bUt, Vt, bVt)
        # validation on the *updated* params with the first 4 latent dims, as in
        # the reference's predict() (torch.gather with tmp=[0,1,2,3]).
        preds = jnp.sum(jnp.take(Ut[:4, :], v_u, axis=1)
                        * jnp.take(Vt[:4, :], v_i, axis=1), axis=0)
        rmse = jnp.sqrt(jnp.mean((preds - truth) ** 2))
        return (Ut, bUt, Vt, bVt), (loss[0, 0], rmse)

    init = (Ut0, jnp.zeros_like(Ut0), Vt0, jnp.zeros_like(Vt0))
    (Ut, _, Vt, _), (losses, rmses) = lax.scan(step, init, None, length=iterations)
    return (Ut[:LATENT, :num_users].T, Vt[:LATENT, :num_items].T,
            jnp.sum(losses) / n_train, jnp.sum(rmses) / n_train)


if __name__ == "__main__":
    num_users, num_items = 32, 300       # small demo; items pad to 384 -> 3 tiles of 128
    n_train, n_valid = 256, 32

    key = jax.random.PRNGKey(0)
    k_pairs, k_rates, k_init = jax.random.split(key, 3)

    # deterministic, duplicate-free (user, item) pairs + integer ratings in [1, 5]
    all_pairs = jnp.stack(
        jnp.meshgrid(jnp.arange(num_users), jnp.arange(num_items), indexing="ij"),
        axis=-1).reshape(-1, 2)
    perm = jax.random.permutation(k_pairs, all_pairs.shape[0])
    pairs = all_pairs[perm][: n_train + n_valid]
    ratings = jax.random.randint(k_rates, (n_train + n_valid,), 1, 6)
    data = jnp.concatenate([pairs, ratings[:, None]], axis=1).astype(jnp.int32)
    train_data = data[:n_train]          # (256, 3): user, item, rating
    valid_data = data[n_train:]          # (32, 3)

    fwd = jax.jit(functools.partial(pmf_forward, tile_n_max=128),
                  static_argnums=(0, 1))
    U, V, mean_loss, mean_rmse = fwd(num_users, num_items, train_data, valid_data, k_init)
    jax.block_until_ready((U, V, mean_loss, mean_rmse))

    assert U.shape == (num_users, LATENT) and V.shape == (num_items, LATENT)
    assert bool(jnp.isfinite(mean_loss)) and bool(jnp.isfinite(mean_rmse))
    print("KERNEL_OK")
</pallas_src>

<mosaic_0001>
module attributes {stable_mosaic.version = 11 : i64} {
  func.func @_fused_step_kernel(%arg0: i32, %arg1: memref<32x128xi8, #tpu.memory_space<vmem>>, %arg2: memref<8x32xf32, #tpu.memory_space<vmem>>, %arg3: memref<8x32xf32, #tpu.memory_space<vmem>>, %arg4: memref<8x128xf32, #tpu.memory_space<vmem>>, %arg5: memref<8x128xf32, #tpu.memory_space<vmem>>, %arg6: memref<1x1xf32, #tpu.memory_space<vmem>>, %arg7: memref<8x32xf32, #tpu.memory_space<vmem>>, %arg8: memref<8x32xf32, #tpu.memory_space<vmem>>, %arg9: memref<8x128xf32, #tpu.memory_space<vmem>>, %arg10: memref<8x128xf32, #tpu.memory_space<vmem>>, %arg11: memref<8x32xf32, #tpu.memory_space<vmem>>, %arg12: memref<1x1xf32, #tpu.memory_space<vmem>>) attributes {dimension_semantics = [#tpu.dimension_semantics<arbitrary>], iteration_bounds = array<i64: 3>, scalar_prefetch = 0 : i64, scratch_operands = 2 : i64, tpu.core_type = #tpu.core_type<tc>, window_params = [{transform_indices = @transform_0, window_bounds = array<i64: 32, 128>}, {pipeline_mode = #tpu.pipeline_mode<synchronous>, transform_indices = @transform_1, window_bounds = array<i64: 8, 32>}, {pipeline_mode = #tpu.pipeline_mode<synchronous>, transform_indices = @transform_2, window_bounds = array<i64: 8, 32>}, {transform_indices = @transform_3, window_bounds = array<i64: 8, 128>}, {transform_indices = @transform_4, window_bounds = array<i64: 8, 128>}, {pipeline_mode = #tpu.pipeline_mode<synchronous>, transform_indices = @transform_5, window_bounds = array<i64: 1, 1>}, {pipeline_mode = #tpu.pipeline_mode<synchronous>, transform_indices = @transform_6, window_bounds = array<i64: 8, 32>}, {pipeline_mode = #tpu.pipeline_mode<synchronous>, transform_indices = @transform_7, window_bounds = array<i64: 8, 32>}, {transform_indices = @transform_8, window_bounds = array<i64: 8, 128>}, {transform_indices = @transform_9, window_bounds = array<i64: 8, 128>}]} {
    %c0_i32 = arith.constant 0 : i32
    %0 = arith.cmpi eq, %arg0, %c0_i32 : i32
    %1 = arith.extui %0 : i1 to i32
    %c0_i32_0 = arith.constant 0 : i32
    %2 = arith.cmpi ne, %1, %c0_i32_0 : i32
    scf.if %2 {
      %cst_32 = arith.constant 0.000000e+00 : f32
      %56 = vector.broadcast %cst_32 : f32 to vector<8x32xf32>
      %c0_33 = arith.constant 0 : index
      %c0_34 = arith.constant 0 : index
      %57 = vector.load %arg11[%c0_33, %c0_34] : memref<8x32xf32, #tpu.memory_space<vmem>>, vector<8x32xf32>
      tpu.vector_store %arg11[%c0_33, %c0_34], %56 {strides = array<i32>} : memref<8x32xf32, #tpu.memory_space<vmem>>, vector<8x32xf32>,
      %cst_35 = arith.constant 0.000000e+00 : f32
      %58 = vector.broadcast %cst_35 : f32 to vector<1x1xf32>
      %c0_36 = arith.constant 0 : index
      %c0_37 = arith.constant 0 : index
      %59 = vector.load %arg12[%c0_36, %c0_37] : memref<1x1xf32, #tpu.memory_space<vmem>>, vector<1x1xf32>
      tpu.vector_store %arg12[%c0_36, %c0_37], %58 {strides = array<i32>} : memref<1x1xf32, #tpu.memory_space<vmem>>, vector<1x1xf32>,
    } else {
    }
    %c0 = arith.constant 0 : index
    %c0_1 = arith.constant 0 : index
    %3 = vector.load %arg2[%c0, %c0_1] : memref<8x32xf32, #tpu.memory_space<vmem>>, vector<8x32xf32>
    %c0_2 = arith.constant 0 : index
    %c0_3 = arith.constant 0 : index
    %4 = vector.load %arg4[%c0_2, %c0_3] : memref<8x128xf32, #tpu.memory_space<vmem>>, vector<8x128xf32>
    %cst = arith.constant dense<0.000000e+00> : vector<32x128xf32>
    %5 = tpu.matmul %3, %4, %cst {dimension_numbers = #tpu.dot_dimension_numbers<[0], [0], [1], [1], [0, 1, 1, 1], [], []>} : vector<8x32xf32>, vector<8x128xf32>, vector<32x128xf32> -> vector<32x128xf32>
    %c0_4 = arith.constant 0 : index
    %c0_5 = arith.constant 0 : index
    %6 = vector.load %arg1[%c0_4, %c0_5] : memref<32x128xi8, #tpu.memory_space<vmem>>, vector<32x128xi8>
    %7 = arith.sitofp %6 : vector<32x128xi8> to vector<32x128xf32>
    %cst_6 = arith.constant 0.000000e+00 : f32
    %8 = vector.broadcast %cst_6 : f32 to vector<32x128xf32>
    %9 = arith.cmpf one, %7, %8 : vector<32x128xf32>
    %10 = arith.subf %7, %5 : vector<32x128xf32>
    %cst_7 = arith.constant 0.000000e+00 : f32
    %11 = vector.broadcast %cst_7 : f32 to vector<32x128xf32>
    %12 = arith.select %9, %10, %11 : vector<32x128xi1>, vector<32x128xf32>
    %c0_8 = arith.constant 0 : index
    %c0_9 = arith.constant 0 : index
    %13 = vector.load %arg12[%c0_8, %c0_9] : memref<1x1xf32, #tpu.memory_space<vmem>>, vector<1x1xf32>
    %14 = arith.mulf %12, %12 : vector<32x128xf32>
    %15 = vector.shape_cast %14 : vector<32x128xf32> to vector<1x32x128xf32>
    %cst_10 = arith.constant dense<0.000000e+00> : vector<1xf32>
    %16 = vector.multi_reduction <add>, %15, %cst_10 [1, 2] : vector<1x32x128xf32> to vector<1xf32>
    %17 = vector.shape_cast %16 : vector<1xf32> to vector<1x1x1xf32>
    %18 = vector.extract %17[0, 0, 0] : f32 from vector<1x1x1xf32>
    %19 = vector.broadcast %18 : f32 to vector<1x1xf32>
    %20 = arith.mulf %4, %4 : vector<8x128xf32>
    %21 = vector.shape_cast %20 : vector<8x128xf32> to vector<1x8x128xf32>
    %cst_11 = arith.constant dense<0.000000e+00> : vector<1xf32>
    %22 = vector.multi_reduction <add>, %21, %cst_11 [1, 2] : vector<1x8x128xf32> to vector<1xf32>
    %23 = vector.shape_cast %22 : vector<1xf32> to vector<1x1x1xf32>
    %24 = vector.extract %23[0, 0, 0] : f32 from vector<1x1x1xf32>
    %25 = vector.broadcast %24 : f32 to vector<1x1xf32>
    %cst_12 = arith.constant 0.00999999977 : f32
    %26 = vector.broadcast %cst_12 : f32 to vector<1x1xf32>
    %27 = arith.mulf %26, %25 : vector<1x1xf32>
    %28 = arith.addf %19, %27 : vector<1x1xf32>
    %29 = arith.addf %13, %28 : vector<1x1xf32>
    %c0_13 = arith.constant 0 : index
    %c0_14 = arith.constant 0 : index
    %30 = vector.load %arg12[%c0_13, %c0_14] : memref<1x1xf32, #tpu.memory_space<vmem>>, vector<1x1xf32>
    tpu.vector_store %arg12[%c0_13, %c0_14], %29 {strides = array<i32>} : memref<1x1xf32, #tpu.memory_space<vmem>>, vector<1x1xf32>,
    %31 = arith.truncf %12 : vector<32x128xf32> to vector<32x128xbf16>
    %c0_15 = arith.constant 0 : index
    %c0_16 = arith.constant 0 : index
    %32 = vector.load %arg11[%c0_15, %c0_16] : memref<8x32xf32, #tpu.memory_space<vmem>>, vector<8x32xf32>
    %33 = arith.truncf %4 : vector<8x128xf32> to vector<8x128xbf16>
    %cst_17 = arith.constant dense<0.000000e+00> : vector<8x32xf32>
    %34 = tpu.matmul %33, %31, %cst_17 {dimension_numbers = #tpu.dot_dimension_numbers<[1], [1], [0], [0], [0, 0, 1, 0], [], []>} : vector<8x128xbf16>, vector<32x128xbf16>, vector<8x32xf32> -> vector<8x32xf32>
    %35 = arith.addf %32, %34 : vector<8x32xf32>
    %c0_18 = arith.constant 0 : index
    %c0_19 = arith.constant 0 : index
    %36 = vector.load %arg11[%c0_18, %c0_19] : memref<8x32xf32, #tpu.memory_space<vmem>>, vector<8x32xf32>
    tpu.vector_store %arg11[%c0_18, %c0_19], %35 {strides = array<i32>} : memref<8x32xf32, #tpu.memory_space<vmem>>, vector<8x32xf32>,
    %37 = arith.truncf %3 : vector<8x32xf32> to vector<8x32xbf16>
    %cst_20 = arith.constant dense<0.000000e+00> : vector<8x128xf32>
    %38 = tpu.matmul %37, %31, %cst_20 {dimension_numbers = #tpu.dot_dimension_numbers<[1], [0], [0], [1], [0, 0, 1, 1], [], []>} : vector<8x32xbf16>, vector<32x128xbf16>, vector<8x128xf32> -> vector<8x128xf32>
    %cst_21 = arith.constant -2.000000e+00 : f32
    %39 = vector.broadcast %cst_21 : f32 to vector<8x128xf32>
    %40 = arith.mulf %39, %38 : vector<8x128xf32>
    %cst_22 = arith.constant 2.000000e-02 : f32
    %41 = vector.broadcast %cst_22 : f32 to vector<8x128xf32>
    %42 = arith.mulf %41, %4 : vector<8x128xf32>
    %43 = arith.addf %40, %42 : vector<8x128xf32>
    %c0_23 = arith.constant 0 : index
    %c0_24 = arith.constant 0 : index
    %44 = vector.load %arg5[%c0_23, %c0_24] : memref<8x128xf32, #tpu.memory_space<vmem>>, vector<8x128xf32>
    %cst_25 = arith.constant 8.000000e-01 : f32
    %45 = vector.broadcast %cst_25 : f32 to vector<8x128xf32>
    %46 = arith.mulf %45, %44 : vector<8x128xf32>
    %47 = arith.addf %46, %43 : vector<8x128xf32>
    %c0_26 = arith.constant 0 : index
    %c0_27 = arith.constant 0 : index
    %48 = vector.load %arg10[%c0_26, %c0_27] : memref<8x128xf32, #tpu.memory_space<vmem>>, vector<8x128xf32>
    tpu.vector_store %arg10[%c0_26, %c0_27], %47 {strides = array<i32>} : memref<8x128xf32, #tpu.memory_space<vmem>>, vector<8x128xf32>,
    %cst_28 = arith.constant 1.000000e-03 : f32
    %49 = vector.broadcast %cst_28 : f32 to vector<8x128xf32>
    %50 = arith.mulf %49, %47 : vector<8x128xf32>
    %51 = arith.subf %4, %50 : vector<8x128xf32>
    %c0_29 = arith.constant 0 : index
    %c0_30 = arith.constant 0 : index
    %52 = vector.load %arg9[%c0_29, %c0_30] : memref<8x128xf32, #tpu.memory_space<vmem>>, vector<8x128xf32>
    tpu.vector_store %arg9[%c0_29, %c0_30], %51 {strides = array<i32>} : memref<8x128xf32, #tpu.memory_space<vmem>>, vector<8x128xf32>,
    %c2_i32 = arith.constant 2 : i32
    %53 = arith.cmpi eq, %arg0, %c2_i32 : i32
    %54 = arith.extui %53 : i1 to i32
    %c0_i32_31 = arith.constant 0 : i32
    %55 = arith.cmpi ne, %54, %c0_i32_31 : i32
    scf.if %55 {
      %c0_32 = arith.constant 0 : index
      %c0_33 = arith.constant 0 : index
      %56 = vector.load %arg11[%c0_32, %c0_33] : memref<8x32xf32, #tpu.memory_space<vmem>>, vector<8x32xf32>
      %cst_34 = arith.constant -2.000000e+00 : f32
      %57 = vector.broadcast %cst_34 : f32 to vector<8x32xf32>
      %58 = arith.mulf %57, %56 : vector<8x32xf32>
      %cst_35 = arith.constant 2.000000e-02 : f32
      %59 = vector.broadcast %cst_35 : f32 to vector<8x32xf32>
      %60 = arith.mulf %59, %3 : vector<8x32xf32>
      %61 = arith.addf %58, %60 : vector<8x32xf32>
      %c0_36 = arith.constant 0 : index
      %c0_37 = arith.constant 0 : index
      %62 = vector.load %arg3[%c0_36, %c0_37] : memref<8x32xf32, #tpu.memory_space<vmem>>, vector<8x32xf32>
      %cst_38 = arith.constant 8.000000e-01 : f32
      %63 = vector.broadcast %cst_38 : f32 to vector<8x32xf32>
      %64 = arith.mulf %63, %62 : vector<8x32xf32>
      %65 = arith.addf %64, %61 : vector<8x32xf32>
      %c0_39 = arith.constant 0 : index
      %c0_40 = arith.constant 0 : index
      %66 = vector.load %arg8[%c0_39, %c0_40] : memref<8x32xf32, #tpu.memory_space<vmem>>, vector<8x32xf32>
      tpu.vector_store %arg8[%c0_39, %c0_40], %65 {strides = array<i32>} : memref<8x32xf32, #tpu.memory_space<vmem>>, vector<8x32xf32>,
      %cst_41 = arith.constant 1.000000e-03 : f32
      %67 = vector.broadcast %cst_41 : f32 to vector<8x32xf32>
      %68 = arith.mulf %67, %65 : vector<8x32xf32>
      %69 = arith.subf %3, %68 : vector<8x32xf32>
      %c0_42 = arith.constant 0 : index
      %c0_43 = arith.constant 0 : index
      %70 = vector.load %arg7[%c0_42, %c0_43] : memref<8x32xf32, #tpu.memory_space<vmem>>, vector<8x32xf32>
      tpu.vector_store %arg7[%c0_42, %c0_43], %69 {strides = array<i32>} : memref<8x32xf32, #tpu.memory_space<vmem>>, vector<8x32xf32>,
      %c0_44 = arith.constant 0 : index
      %c0_45 = arith.constant 0 : index
      %71 = vector.load %arg12[%c0_44, %c0_45] : memref<1x1xf32, #tpu.memory_space<vmem>>, vector<1x1xf32>
      %72 = arith.mulf %3, %3 : vector<8x32xf32>
      %73 = vector.shape_cast %72 : vector<8x32xf32> to vector<1x8x32xf32>
      %cst_46 = arith.constant dense<0.000000e+00> : vector<1xf32>
      %74 = vector.multi_reduction <add>, %73, %cst_46 [1, 2] : vector<1x8x32xf32> to vector<1xf32>
      %75 = vector.shape_cast %74 : vector<1xf32> to vector<1x1x1xf32>
      %76 = vector.extract %75[0, 0, 0] : f32 from vector<1x1x1xf32>
      %77 = vector.broadcast %76 : f32 to vector<1x1xf32>
      %cst_47 = arith.constant 0.00999999977 : f32
      %78 = vector.broadcast %cst_47 : f32 to vector<1x1xf32>
      %79 = arith.mulf %78, %77 : vector<1x1xf32>
      %80 = arith.addf %71, %79 : vector<1x1xf32>
      %c0_48 = arith.constant 0 : index
      %c0_49 = arith.constant 0 : index
      %81 = vector.load %arg6[%c0_48, %c0_49] : memref<1x1xf32, #tpu.memory_space<vmem>>, vector<1x1xf32>
      tpu.vector_store %arg6[%c0_48, %c0_49], %80 {strides = array<i32>} : memref<1x1xf32, #tpu.memory_space<vmem>>, vector<1x1xf32>,
    } else {
    }
    return
  }
  func.func @transform_0(%arg0: i32) -> (i32, i32) {
    %c0_i32 = arith.constant 0 : i32
    %c0_i32_0 = arith.constant 0 : i32
    return %c0_i32, %arg0 : i32, i32
  }
  func.func @transform_1(%arg0: i32) -> (i32, i32) {
    %c0_i32 = arith.constant 0 : i32
    %c0_i32_0 = arith.constant 0 : i32
    %c0_i32_1 = arith.constant 0 : i32
    return %c0_i32, %c0_i32_0 : i32, i32
  }
  func.func @transform_2(%arg0: i32) -> (i32, i32) {
    %c0_i32 = arith.constant 0 : i32
    %c0_i32_0 = arith.constant 0 : i32
    %c0_i32_1 = arith.constant 0 : i32
    return %c0_i32, %c0_i32_0 : i32, i32
  }
  func.func @transform_3(%arg0: i32) -> (i32, i32) {
    %c0_i32 = arith.constant 0 : i32
    %c0_i32_0 = arith.constant 0 : i32
    return %c0_i32, %arg0 : i32, i32
  }
  func.func @transform_4(%arg0: i32) -> (i32, i32) {
    %c0_i32 = arith.constant 0 : i32
    %c0_i32_0 = arith.constant 0 : i32
    return %c0_i32, %arg0 : i32, i32
  }
  func.func @transform_5(%arg0: i32) -> (i32, i32) {
    %c0_i32 = arith.constant 0 : i32
    %c0_i32_0 = arith.constant 0 : i32
    %c0_i32_1 = arith.constant 0 : i32
    return %c0_i32, %c0_i32_0 : i32, i32
  }
  func.func @transform_6(%arg0: i32) -> (i32, i32) {
    %c0_i32 = arith.constant 0 : i32
    %c0_i32_0 = arith.constant 0 : i32
    %c0_i32_1 = arith.constant 0 : i32
    return %c0_i32, %c0_i32_0 : i32, i32
  }
  func.func @transform_7(%arg0: i32) -> (i32, i32) {
    %c0_i32 = arith.constant 0 : i32
    %c0_i32_0 = arith.constant 0 : i32
    %c0_i32_1 = arith.constant 0 : i32
    return %c0_i32, %c0_i32_0 : i32, i32
  }
  func.func @transform_8(%arg0: i32) -> (i32, i32) {
    %c0_i32 = arith.constant 0 : i32
    %c0_i32_0 = arith.constant 0 : i32
    return %c0_i32, %arg0 : i32, i32
  }
  func.func @transform_9(%arg0: i32) -> (i32, i32) {
    %c0_i32 = arith.constant 0 : i32
    %c0_i32_0 = arith.constant 0 : i32
    return %c0_i32, %arg0 : i32, i32
  }
}

</mosaic_0001>

<llo_original>
// kernel: custom-call.6
$region0: #{custom-call.6}
  %s0 = inlined_call_operand.vmem [shape: f32[20], index: 0, kind: output, shape index: {}]

// kernel: closed_call.7
$region0: #{closed_call.7}
  #allocation0 [shape = 'u32[]', space=smem, size = 0x4, offset = 0x4, fixed_abs, tag = 'smem constant byte address 0x4 - core index']
  #allocation1 [shape = 'u32[144,128]{1,0:T(1,128)}', space=vmem, size = 0x12000, scoped, tag = 'internal scratch']
  #allocation2 [shape = 'f32[8,32]{1,0:T(8,128)}', space=vmem, size = 0x1000, scoped, tag = 'scratch operand']
  #allocation3 [shape = 'f32[1,1]{1,0:T(1,128)}', space=vmem, size = 0x200, scoped, tag = 'scratch operand']
  %s0 = inlined_call_operand.vmem [shape: s8[32,384], index: 0, kind: input, shape index: {}]
  %s1 = inlined_call_operand.vmem [shape: f32[8,32], index: 1, kind: input, shape index: {}, may-alias: {1,6}]
  %s2 = inlined_call_operand.vmem [shape: f32[8,32], index: 2, kind: input, shape index: {}, may-alias: {2,7}]
  %s3 = inlined_call_operand.vmem [shape: f32[8,384], index: 3, kind: input, shape index: {}, may-alias: {3,8}]
  %s4 = inlined_call_operand.vmem [shape: f32[8,384], index: 4, kind: input, shape index: {}, may-alias: {4,9}]
  %s5 = inlined_call_operand.hbm [shape: f32[1,1], index: 5, kind: output, shape index: {0}]
  %s6 = inlined_call_operand.vmem [shape: f32[8,32], index: 6, kind: output, shape index: {1}, may-alias: {1,6}]
  %s7 = inlined_call_operand.vmem [shape: f32[8,32], index: 7, kind: output, shape index: {2}, may-alias: {2,7}]
  %s8 = inlined_call_operand.vmem [shape: f32[8,384], index: 8, kind: output, shape index: {3}, may-alias: {3,8}]
  %s9 = inlined_call_operand.vmem [shape: f32[8,384], index: 9, kind: output, shape index: {4}, may-alias: {4,9}]
  %10 = xla_tuple %s5, %s6, %s7, %s8, %s9
  %s11 = sld [smem:[#allocation0]]
  $region93: #{closed_call.7} parent=0
    _
  %s13 = ssub.s32 1, %s11
  %s14 = scalar_select 0, %s13, %s11
  $region1: #{closed_call.7} parent=0
    #allocation4 [shape = 'u8[512]{0}', space=vmem, size = 0x400, scoped, tag = 'output window, operand 0, single buffered']
    #allocation5 [shape = 's32[2]{0}', space=sflag, size = 0x8, scoped, tag = 'scoped memory for closed_call.7']
    %15 = vsyncpa [#allocation5], 0
    loop: start=0, step=1, limit=5
    $region2: #{closed_call.7} parent=1 // loop_pre_header
      _
    $region3: #{closed_call.7} parent=1 // loop_header
      %s17 = sphi 0, %s21
      %p18 = scmp.ge.s32.totalorder %s17, 5
      %s27 = sphi 0, %s29
      %s30 = sphi 0, %s27
      %s31 = sphi 0, %s30
      %s47 = sphi 0, %s31
      %s51 = sphi 0, %s51
      %s53 = sphi 0, %s51
      %s54 = sphi 0, %s53
      %s68 = sphi 0, %s54
      %s72 = sphi 0, %s72
      %s74 = sphi 0, %s72
      %s75 = sphi 0, %s74
      %s89 = sphi 0, %s75
      %s95 = sphi 0, %s97
      %s98 = sphi 0, %s95
      %s99 = sphi 0, %s98
      %s115 = sphi 0, %s99
      %s121 = sphi 0, %s123
      %s124 = sphi 0, %s121
      %s125 = sphi 0, %s124
      %s141 = sphi 0, %s125
      %s145 = sphi 0, %s145
      %s147 = sphi 0, %s145
      %s148 = sphi 0, %s147
      %s162 = sphi 0, %s148
      %s166 = sphi 0, %s166
      %s168 = sphi 0, %s166
      %s169 = sphi 0, %s168
      %s183 = sphi 0, %s169
      %s187 = sphi 0, %s187
      %s189 = sphi 0, %s187
      %s190 = sphi 0, %s189
      %s204 = sphi 0, %s190
      %s210 = sphi 0, %s212
      %s213 = sphi 0, %s210
      %s214 = sphi 0, %s213
      %s230 = sphi 0, %s214
      %s236 = sphi 0, %s238
      %s239 = sphi 0, %s236
      %s240 = sphi 0, %s239
      %s256 = sphi 0, %s240
    $region4: #{closed_call.7} parent=1 // loop_header_branch
      %20 = sbr.rel (%p18) target = $region8
    $region5: #{closed_call.7} parent=1 // loop_body
      %s22 = ssub.s32 %s17, 1
      %s23 = ssub.s32 %s17, 2
      %s24 = sadd.s32 %s17, 1
      %s25 = ssub.s32 %s17, %s24
      %p26 = scmp.eq.s32.totalorder %s25, 0
      %s28 = sadd.s32 %s27, 1
      %s29 = scalar_select %p26, %s27, %s28
      %p32 = pneg %p26
      %p33 = scmp.eq.s32.totalorder %s17, 2
      %p34 = por %p32, %p33
      %p35 = scmp.ne.s32.totalorder %s27, %s30
      %p36 = scmp.eq.s32.totalorder %s17, 0
      %p37 = por %p35, %p36
      %p38 = scmp.ne.s32.totalorder %s27, %s30
      %p39 = scmp.eq.s32.totalorder %s22, 2
      %p40 = por %p38, %p39
      %p41 = scmp.ne.s32.totalorder %s30, %s31
      %p42 = scmp.eq.s32.totalorder %s22, 0
      %p43 = por %p41, %p42
      %p44 = scmp.ne.s32.totalorder %s30, %s31
      %p45 = scmp.eq.s32.totalorder %s23, 2
      %p46 = por %p44, %p45
      %p48 = scmp.ne.s32.totalorder %s31, %s47
      %p49 = scmp.eq.s32.totalorder %s23, 0
      %p50 = por %p48, %p49
      %s52 = sadd.s32 %s51, 1
      %p55 = scmp.eq.s32.totalorder %s17, 2
      %p56 = scmp.ne.s32.totalorder %s51, %s53
      %p57 = scmp.eq.s32.totalorder %s17, 0
      %p58 = por %p56, %p57
      %p59 = scmp.ne.s32.totalorder %s51, %s53
      %p60 = scmp.eq.s32.totalorder %s22, 2
      %p61 = por %p59, %p60
      %p62 = scmp.ne.s32.totalorder %s53, %s54
      %p63 = scmp.eq.s32.totalorder %s22, 0
      %p64 = por %p62, %p63
      %p65 = scmp.ne.s32.totalorder %s53, %s54
      %p66 = scmp.eq.s32.totalorder %s23, 2
      %p67 = por %p65, %p66
      %p69 = scmp.ne.s32.totalorder %s54, %s68
      %p70 = scmp.eq.s32.totalorder %s23, 0
      %p71 = por %p69, %p70
      %s73 = sadd.s32 %s72, 1
      %p76 = scmp.eq.s32.totalorder %s17, 2
      %p77 = scmp.ne.s32.totalorder %s72, %s74
      %p78 = scmp.eq.s32.totalorder %s17, 0
      %p79 = por %p77, %p78
      %p80 = scmp.ne.s32.totalorder %s72, %s74
      %p81 = scmp.eq.s32.totalorder %s22, 2
      %p82 = por %p80, %p81
      %p83 = scmp.ne.s32.totalorder %s74, %s75
      %p84 = scmp.eq.s32.totalorder %s22, 0
      %p85 = por %p83, %p84
      %p86 = scmp.ne.s32.totalorder %s74, %s75
      %p87 = scmp.eq.s32.totalorder %s23, 2
      %p88 = por %p86, %p87
      %p90 = scmp.ne.s32.totalorder %s75, %s89
      %p91 = scmp.eq.s32.totalorder %s23, 0
      %p92 = por %p90, %p91
      %s93 = ssub.s32 %s17, %s24
      %p94 = scmp.eq.s32.totalorder %s93, 0
      %s96 = sadd.s32 %s95, 1
      %s97 = scalar_select %p94, %s95, %s96
      %p100 = pneg %p94
      %p101 = scmp.eq.s32.totalorder %s17, 2
      %p102 = por %p100, %p101
      %p103 = scmp.ne.s32.totalorder %s95, %s98
      %p104 = scmp.eq.s32.totalorder %s17, 0
      %p105 = por %p103, %p104
      %p106 = scmp.ne.s32.totalorder %s95, %s98
      %p107 = scmp.eq.s32.totalorder %s22, 2
      %p108 = por %p106, %p107
      %p109 = scmp.ne.s32.totalorder %s98, %s99
      %p110 = scmp.eq.s32.totalorder %s22, 0
      %p111 = por %p109, %p110
      %p112 = scmp.ne.s32.totalorder %s98, %s99
      %p113 = scmp.eq.s32.totalorder %s23, 2
      %p114 = por %p112, %p113
      %p116 = scmp.ne.s32.totalorder %s99, %s115
      %p117 = scmp.eq.s32.totalorder %s23, 0
      %p118 = por %p116, %p117
      %s119 = ssub.s32 %s17, %s24
      %p120 = scmp.eq.s32.totalorder %s119, 0
      %s122 = sadd.s32 %s121, 1
      %s123 = scalar_select %p120, %s121, %s122
      %p126 = pneg %p120
      %p127 = scmp.eq.s32.totalorder %s17, 2
      %p128 = por %p126, %p127
      %p129 = scmp.ne.s32.totalorder %s121, %s124
      %p130 = scmp.eq.s32.totalorder %s17, 0
      %p131 = por %p129, %p130
      %p132 = scmp.ne.s32.totalorder %s121, %s124
      %p133 = scmp.eq.s32.totalorder %s22, 2
      %p134 = por %p132, %p133
      %p135 = scmp.ne.s32.totalorder %s124, %s125
      %p136 = scmp.eq.s32.totalorder %s22, 0
      %p137 = por %p135, %p136
      %p138 = scmp.ne.s32.totalorder %s124, %s125
      %p139 = scmp.eq.s32.totalorder %s23, 2
      %p140 = por %p138, %p139
      %p142 = scmp.ne.s32.totalorder %s125, %s141
      %p143 = scmp.eq.s32.totalorder %s23, 0
      %p144 = por %p142, %p143
      %s146 = sadd.s32 %s145, 1
      %p149 = scmp.eq.s32.totalorder %s17, 2
      %p150 = scmp.ne.s32.totalorder %s145, %s147
      %p151 = scmp.eq.s32.totalorder %s17, 0
      %p152 = por %p150, %p151
      %p153 = scmp.ne.s32.totalorder %s145, %s147
      %p154 = scmp.eq.s32.totalorder %s22, 2
      %p155 = por %p153, %p154
      %p156 = scmp.ne.s32.totalorder %s147, %s148
      %p157 = scmp.eq.s32.totalorder %s22, 0
      %p158 = por %p156, %p157
      %p159 = scmp.ne.s32.totalorder %s147, %s148
      %p160 = scmp.eq.s32.totalorder %s23, 2
      %p161 = por %p159, %p160
      %p163 = scmp.ne.s32.totalorder %s148, %s162
      %p164 = scmp.eq.s32.totalorder %s23, 0
      %p165 = por %p163, %p164
      %s167 = sadd.s32 %s166, 1
      %p170 = scmp.eq.s32.totalorder %s17, 2
      %p171 = scmp.ne.s32.totalorder %s166, %s168
      %p172 = scmp.eq.s32.totalorder %s17, 0
      %p173 = por %p171, %p172
      %p174 = scmp.ne.s32.totalorder %s166, %s168
      %p175 = scmp.eq.s32.totalorder %s22, 2
      %p176 = por %p174, %p175
      %p177 = scmp.ne.s32.totalorder %s168, %s169
      %p178 = scmp.eq.s32.totalorder %s22, 0
      %p179 = por %p177, %p178
      %p180 = scmp.ne.s32.totalorder %s168, %s169
      %p181 = scmp.eq.s32.totalorder %s23, 2
      %p182 = por %p180, %p181
      %p184 = scmp.ne.s32.totalorder %s169, %s183
      %p185 = scmp.eq.s32.totalorder %s23, 0
      %p186 = por %p184, %p185
      %s188 = sadd.s32 %s187, 1
      %p191 = scmp.eq.s32.totalorder %s17, 2
      %p192 = scmp.ne.s32.totalorder %s187, %s189
      %p193 = scmp.eq.s32.totalorder %s17, 0
      %p194 = por %p192, %p193
      %p195 = scmp.ne.s32.totalorder %s187, %s189
      %p196 = scmp.eq.s32.totalorder %s22, 2
      %p197 = por %p195, %p196
      %p198 = scmp.ne.s32.totalorder %s189, %s190
      %p199 = scmp.eq.s32.totalorder %s22, 0
      %p200 = por %p198, %p199
      %p201 = scmp.ne.s32.totalorder %s189, %s190
      %p202 = scmp.eq.s32.totalorder %s23, 2
      %p203 = por %p201, %p202
      %p205 = scmp.ne.s32.totalorder %s190, %s204
      %p206 = scmp.eq.s32.totalorder %s23, 0
      %p207 = por %p205, %p206
      %s208 = ssub.s32 %s17, %s24
      %p209 = scmp.eq.s32.totalorder %s208, 0
      %s211 = sadd.s32 %s210, 1
      %s212 = scalar_select %p209, %s210, %s211
      %p215 = pneg %p209
      %p216 = scmp.eq.s32.totalorder %s17, 2
      %p217 = por %p215, %p216
      %p218 = scmp.ne.s32.totalorder %s210, %s213
      %p219 = scmp.eq.s32.totalorder %s17, 0
      %p220 = por %p218, %p219
      %p221 = scmp.ne.s32.totalorder %s210, %s213
      %p222 = scmp.eq.s32.totalorder %s22, 2
      %p223 = por %p221, %p222
      %p224 = scmp.ne.s32.totalorder %s213, %s214
      %p225 = scmp.eq.s32.totalorder %s22, 0
      %p226 = por %p224, %p225
      %p227 = scmp.ne.s32.totalorder %s213, %s214
      %p228 = scmp.eq.s32.totalorder %s23, 2
      %p229 = por %p227, %p228
      %p231 = scmp.ne.s32.totalorder %s214, %s230
      %p232 = scmp.eq.s32.totalorder %s23, 0
      %p233 = por %p231, %p232
      %s234 = ssub.s32 %s17, %s24
      %p235 = scmp.eq.s32.totalorder %s234, 0
      %s237 = sadd.s32 %s236, 1
      %s238 = scalar_select %p235, %s236, %s237
      %p241 = pneg %p235
      %p242 = scmp.eq.s32.totalorder %s17, 2
      %p243 = por %p241, %p242
      %p244 = scmp.ne.s32.totalorder %s236, %s239
      %p245 = scmp.eq.s32.totalorder %s17, 0
      %p246 = por %p244, %p245
      %p247 = scmp.ne.s32.totalorder %s236, %s239
      %p248 = scmp.eq.s32.totalorder %s22, 2
      %p249 = por %p247, %p248
      %p250 = scmp.ne.s32.totalorder %s239, %s240
      %p251 = scmp.eq.s32.totalorder %s22, 0
      %p252 = por %p250, %p251
      %p253 = scmp.ne.s32.totalorder %s239, %s240
      %p254 = scmp.eq.s32.totalorder %s23, 2
      %p255 = por %p253, %p254
      %p257 = scmp.ne.s32.totalorder %s240, %s256
      %p258 = scmp.eq.s32.totalorder %s23, 0
      %p259 = por %p257, %p258
      %p260 = scmp.le.s32.totalorder 1, %s17
      %p261 = scmp.lt.s32.totalorder %s17, 4
      %p262 = pnand %p260, %p261
      %p263 = pneg %p262
      // Predicated region
      $region9: #{closed_call.7} parent=5 // pred_check
        _
      $region10: #{closed_call.7} parent=5 // pred_check_branch
        %265 = sbr.rel (%p262) target = $region12
      $region11: #{closed_call.7} parent=5 // pred_region
        %s266 = ssub.s32 %s17, 1
        // Predicated region
        $region13: #{closed_call.7} parent=11 // pred_check
          %p267 = pneg %p64
        $region14: #{closed_call.7} parent=11 // pred_check_branch
          %269 = sbr.rel (%p267) target = $region16
        $region15: #{closed_call.7} parent=11 // pred_region
          _
        $region16: #{closed_call.7} parent=11 // pred_fallthru
          _
        // Predicated region
        $region17: #{closed_call.7} parent=11 // pred_check
          %p270 = pneg %p85
        $region18: #{closed_call.7} parent=11 // pred_check_branch
          %272 = sbr.rel (%p270) target = $region20
        $region19: #{closed_call.7} parent=11 // pred_region
          _
        $region20: #{closed_call.7} parent=11 // pred_fallthru
          _
      $region12: #{closed_call.7} parent=5 // pred_fallthru
        _
      %p273 = scmp.lt.s32.totalorder %s17, 3
      // Predicated region
      $region21: #{closed_call.7} parent=5 // pred_check
        %p274 = pneg %p273
      $region22: #{closed_call.7} parent=5 // pred_check_branch
        %276 = sbr.rel (%p274) target = $region24
      $region23: #{closed_call.7} parent=5 // pred_region
        // Predicated region
        $region25: #{closed_call.7} parent=23 // pred_check
          %p277 = pneg %p37
        $region26: #{closed_call.7} parent=23 // pred_check_branch
          %279 = sbr.rel (%p277) target = $region28
        $region27: #{closed_call.7} parent=23 // pred_region
          %p280 = scmp.lt.s32.totalorder %s17, 2
          %s281 = scalar_select %p280, %s17, 2
          %s282 = smul.addr %s281, 8
          %s283 = scalar_lea.vmem %s0, %s282
        $region28: #{closed_call.7} parent=23 // pred_fallthru
          _
        // Predicated region
        $region29: #{closed_call.7} parent=23 // pred_check
          %p284 = pneg %p105
        $region30: #{closed_call.7} parent=23 // pred_check_branch
          %286 = sbr.rel (%p284) target = $region32
        $region31: #{closed_call.7} parent=23 // pred_region
          %p287 = scmp.lt.s32.totalorder %s17, 2
          %s288 = scalar_select %p287, %s17, 2
          %s289 = smul.addr %s288, 8
          %s290 = scalar_lea.vmem %s3, %s289
        $region32: #{closed_call.7} parent=23 // pred_fallthru
          _
        // Predicated region
        $region33: #{closed_call.7} parent=23 // pred_check
          %p291 = pneg %p131
        $region34: #{closed_call.7} parent=23 // pred_check_branch
          %293 = sbr.rel (%p291) target = $region36
        $region35: #{closed_call.7} parent=23 // pred_region
          %p294 = scmp.lt.s32.totalorder %s17, 2
          %s295 = scalar_select %p294, %s17, 2
          %s296 = smul.addr %s295, 8
          %s297 = scalar_lea.vmem %s4, %s296
        $region36: #{closed_call.7} parent=23 // pred_fallthru
          _
      $region24: #{closed_call.7} parent=5 // pred_fallthru
        _
      %p298 = scmp.le.s32.totalorder 1, %s17
      %p299 = scmp.lt.s32.totalorder %s17, 4
      %p300 = pnand %p298, %p299
      %p301 = pneg %p300
      // Predicated region
      $region37: #{closed_call.7} parent=5 // pred_check
        _
      $region38: #{closed_call.7} parent=5 // pred_check_branch
        %303 = sbr.rel (%p300) target = $region40
      $region39: #{closed_call.7} parent=5 // pred_region
        %s304 = ssub.s32 %s17, 1
        %p305 = scmp.lt.s32.totalorder %s22, 2
        %s306 = scalar_select %p305, %s22, 2
        %s307 = smul.addr %s306, 8
        %s308 = scalar_lea.vmem %s0, %s307
        %p309 = pneg %p43
        %p310 = pneg %p40
        %p311 = pneg %p64
        %p312 = pneg %p61
        %p313 = pneg %p85
        %p314 = pneg %p82
        %p315 = scmp.lt.s32.totalorder %s22, 2
        %s316 = scalar_select %p315, %s22, 2
        %s317 = smul.addr %s316, 8
        %s318 = scalar_lea.vmem %s3, %s317
        %p319 = pneg %p111
        %p320 = pneg %p108
        %p321 = scmp.lt.s32.totalorder %s22, 2
        %s322 = scalar_select %p321, %s22, 2
        %s323 = smul.addr %s322, 8
        %s324 = scalar_lea.vmem %s4, %s323
        %p325 = pneg %p137
        %p326 = pneg %p134
        %p327 = pneg %p158
        %p328 = pneg %p155
        %p329 = pneg %p179
        %p330 = pneg %p176
        %p331 = pneg %p200
        %p332 = pneg %p197
        %p333 = pneg %p226
        %p334 = pneg %p223
        %p335 = scmp.lt.s32.totalorder %s22, 2
        %s336 = scalar_select %p335, %s22, 2
        %s337 = smul.addr %s336, 8
        %s338 = scalar_lea.vmem %s8, %s337
        %p339 = pneg %p252
        %p340 = pneg %p249
        %p341 = scmp.lt.s32.totalorder %s22, 2
        %s342 = scalar_select %p341, %s22, 2
        %s343 = smul.addr %s342, 8
        %s344 = scalar_lea.vmem %s9, %s343
        %p345 = scmp.lt.s32.totalorder %s22, 2
        %s346 = scalar_select %p345, %s22, 2
        %s347 = smul.addr %s346, 8
        %s348 = scalar_lea.vmem %s0, %s347
        %p349 = scmp.lt.s32.totalorder %s22, 2
        %s350 = scalar_select %p349, %s22, 2
        %s351 = smul.addr %s350, 8
        %s352 = scalar_lea.vmem %s3, %s351
        %p353 = scmp.lt.s32.totalorder %s22, 2
        %s354 = scalar_select %p353, %s22, 2
        %s355 = smul.addr %s354, 8
        %s356 = scalar_lea.vmem %s4, %s355
        %p357 = scmp.lt.s32.totalorder %s22, 2
        %s358 = scalar_select %p357, %s22, 2
        %s359 = smul.addr %s358, 8
        %s360 = scalar_lea.vmem %s8, %s359
        %p361 = scmp.lt.s32.totalorder %s22, 2
        %s362 = scalar_select %p361, %s22, 2
        %s363 = smul.addr %s362, 8
        %s364 = scalar_lea.vmem %s9, %s363
        %p366 = scmp.eq.s32.totalorder %s22, 0
        // Predicated region
        $region41: #{closed_call.7} parent=39 // pred_check
          %p367 = pneg %p366
        $region42: #{closed_call.7} parent=39 // pred_check_branch
          %369 = sbr.rel (%p367) target = $region44
        $region43: #{closed_call.7} parent=39 // pred_region
          %vm370 = vcmask 261120
          %371 = vst.msk [vmem:[#allocation2] sm:$0xff] %vm370, 0.0
          %vm372 = vcmask 0
          %373 = vst.msk [vmem:[#allocation3] sm:$0x1] %vm372, 0.0
        $region44: #{closed_call.7} parent=39 // pred_fallthru
          _
        %v374 = vld [vmem:[%s1] sm:$0xff]
        %v375 = vld [vmem:[%s352] sm:$0xff]
        %376 = vxpose.xlu0.b32.start [1/16] %v374, 128
        %377 = vxpose.xlu0.b32.cont [2/16] 0.0, 128
        %378 = vxpose.xlu0.b32.cont [3/16] 0.0, 128
        %379 = vxpose.xlu0.b32.cont [4/16] 0.0, 128
        %380 = vxpose.xlu0.b32.cont [5/16] 0.0, 128
        %381 = vxpose.xlu0.b32.cont [6/16] 0.0, 128
        %382 = vxpose.xlu0.b32.cont [7/16] 0.0, 128
        %383 = vxpose.xlu0.b32.cont [8/16] 0.0, 128
        %384 = vxpose.xlu0.b32.cont [9/16] 0.0, 128
        %385 = vxpose.xlu0.b32.cont [10/16] 0.0, 128
        %386 = vxpose.xlu0.b32.cont [11/16] 0.0, 128
        %387 = vxpose.xlu0.b32.cont [12/16] 0.0, 128
        %388 = vxpose.xlu0.b32.cont [13/16] 0.0, 128
        %389 = vxpose.xlu0.b32.cont [14/16] 0.0, 128
        %390 = vxpose.xlu0.b32.cont [15/16] 0.0, 128
        %391 = vxpose.xlu0.b32.end [16/16] 0.0, 128
        %v392 = vpop.trf.xlu0
        %v393 = vpop.trf.xlu0
        %v394 = vpop.trf.xlu0
        %v395 = vpop.trf.xlu0
        %v396 = vpop.trf.xlu0
        %v397 = vpop.trf.xlu0
        %v398 = vpop.trf.xlu0
        %v399 = vpop.trf.xlu0
        %v400 = vpop.trf.xlu0
        %v401 = vpop.trf.xlu0
        %v402 = vpop.trf.xlu0
        %v403 = vpop.trf.xlu0
        %v404 = vpop.trf.xlu0
        %v405 = vpop.trf.xlu0
        %v406 = vpop.trf.xlu0
        %v407 = vpop.trf.xlu0
        %vm408 = vcmask 64512
        %v410 = vsel %vm408, %v392, 0
        %v413 = vsel %vm408, %v393, 0
        %v416 = vsel %vm408, %v394, 0
        %v419 = vsel %vm408, %v395, 0
        %421 = vmatprep.subr.mxu0 0.0
        %422 = vmatpush1.msra.mxu0 %v375
        %423 = vmatprep.subr.mxu0 0.0
        %424 = vmatpush1.msra.mxu0 0.0
        %425 = vmatprep.subr.mxu0 0.0
        %426 = vmatpush1.msra.mxu0 0.0
        %427 = vmatprep.subr.mxu0 0.0
        %428 = vmatpush1.msra.mxu0 0.0
        %429 = vmatprep.subr.mxu0 0.0
        %430 = vmatpush1.msra.mxu0 0.0
        %431 = vmatprep.subr.mxu0 0.0
        %432 = vmatpush1.msra.mxu0 0.0
        %433 = vmatprep.subr.mxu0 0.0
        %434 = vmatpush1.msra.mxu0 0.0
        %435 = vmatprep.subr.mxu0 0.0
        %436 = vmatpush1.msra.mxu0 0.0
        %437 = vmatprep.subr.mxu0 0.0
        %438 = vmatpush1.msra.mxu0 0.0
        %439 = vmatprep.subr.mxu0 0.0
        %440 = vmatpush1.msra.mxu0 0.0
        %441 = vmatprep.subr.mxu0 0.0
        %442 = vmatpush1.msra.mxu0 0.0
        %443 = vmatprep.subr.mxu0 0.0
        %444 = vmatpush1.msra.mxu0 0.0
        %445 = vmatprep.subr.mxu0 0.0
        %446 = vmatpush1.msra.mxu0 0.0
        %447 = vmatprep.subr.mxu0 0.0
        %448 = vmatpush1.msra.mxu0 0.0
        %449 = vmatprep.subr.mxu0 0.0
        %450 = vmatpush1.msra.mxu0 0.0
        %451 = vmatprep.subr.mxu0 0.0
        %452 = vmatpush1.msra.mxu0 0.0
        %453 = vmatprep.subr.mxu0 0.0
        %454 = vmatpush1.msra.mxu0 0.0
        %455 = vmatprep.subr.mxu0 0.0
        %456 = vmatpush1.msra.mxu0 0.0
        %457 = vmatprep.subr.mxu0 0.0
        %458 = vmatpush1.msra.mxu0 0.0
        %459 = vmatprep.subr.mxu0 0.0
        %460 = vmatpush1.msra.mxu0 0.0
        %461 = vmatprep.subr.mxu0 0.0
        %462 = vmatpush1.msra.mxu0 0.0
        %463 = vmatprep.subr.mxu0 0.0
        %464 = vmatpush1.msra.mxu0 0.0
        %465 = vmatprep.subr.mxu0 0.0
        %466 = vmatpush1.msra.mxu0 0.0
        %467 = vmatprep.subr.mxu0 0.0
        %468 = vmatpush1.msra.mxu0 0.0
        %469 = vmatprep.subr.mxu0 0.0
        %470 = vmatpush1.msra.mxu0 0.0
        %471 = vmatprep.subr.mxu0 0.0
        %472 = vmatpush1.msra.mxu0 0.0
        %473 = vmatprep.subr.mxu0 0.0
        %474 = vmatpush1.msra.mxu0 0.0
        %475 = vmatprep.subr.mxu0 0.0
        %476 = vmatpush1.msra.mxu0 0.0
        %477 = vmatprep.subr.mxu0 0.0
        %478 = vmatpush1.msra.mxu0 0.0
        %479 = vmatprep.subr.mxu0 0.0
        %480 = vmatpush1.msra.mxu0 0.0
        %481 = vmatprep.subr.mxu0 0.0
        %482 = vmatpush1.msra.mxu0 0.0
        %483 = vmatprep.subr.mxu0 0.0
        %484 = vmatpush1.msra.mxu0 0.0
        %485 = vmatprep.mubr.f32.mxu0 0.0
        %486 = vmatmul.mubr.f32.gmra.mrb[0].mxu0 %v410
        %v487 = vpop.f32.mrb[0].mxu0
        %v488 = vadd.f32 0.0, %v487
        %v489 = vpop.f32.mrb[0].mxu0
        %490 = vmatprep.mubr.f32.mxu0 0.0
        %491 = vmatmul.mubr.f32.gmra.mrb[0].mxu0 %v413
        %v492 = vpop.f32.mrb[0].mxu0
        %v493 = vadd.f32 0.0, %v492
        %v494 = vpop.f32.mrb[0].mxu0
        %495 = vmatprep.mubr.f32.mxu0 0.0
        %496 = vmatmul.mubr.f32.gmra.mrb[0].mxu0 %v416
        %v497 = vpop.f32.mrb[0].mxu0
        %v498 = vadd.f32 0.0, %v497
        %v499 = vpop.f32.mrb[0].mxu0
        %500 = vmatprep.mubr.f32.mxu0 0.0
        %501 = vmatmul.mubr.f32.gmra.mrb[0].mxu0 %v419
        %v502 = vpop.f32.mrb[0].mxu0
        %v503 = vadd.f32 0.0, %v502
        %v504 = vpop.f32.mrb[0].mxu0
        %505 = vdwg.mxu0
        %v506 = vld [vmem:[%s348] sm:$0xff]
        %v507 = vunpack.c.0.s8 %v506
        %v508 = vunpack.c.1.s8 %v506
        %v509 = vunpack.c.2.s8 %v506
        %v510 = vunpack.c.3.s8 %v506
        %v511 = vcvt.s32.f32 %v507
        %v512 = vcvt.s32.f32 %v508
        %v513 = vcvt.s32.f32 %v509
        %v514 = vcvt.s32.f32 %v510
        %vm515 = vcmp.ne.f32.partialorder %v511, 0.0
        %vm516 = vcmp.ne.f32.partialorder %v512, 0.0
        %vm517 = vcmp.ne.f32.partialorder %v513, 0.0
        %vm518 = vcmp.ne.f32.partialorder %v514, 0.0
        %v519 = vsub.f32 %v511, %v488
        %v520 = vsub.f32 %v512, %v493
        %v521 = vsub.f32 %v513, %v498
        %v522 = vsub.f32 %v514, %v503
        %v523 = vsel %vm515, %v519, 0.0
        %v524 = vsel %vm516, %v520, 0.0
        %v525 = vsel %vm517, %v521, 0.0
        %v526 = vsel %vm518, %v522, 0.0
        %v527 = vld [vmem:[#allocation3] sm:$0x1]
        %v528 = vmul.f32 %v523, %v523
        %v529 = vmul.f32 %v524, %v524
        %v530 = vmul.f32 %v525, %v525
        %v531 = vmul.f32 %v526, %v526
        %v532 = vadd.f32 %v528, %v529
        %v533 = vadd.f32 %v532, %v530
        %v534 = vadd.f32 %v533, %v531
        %535 = vadd.xlane.f32.xlu0 %v534
        %v536 = vpop.xlane.xlu0 %535
        %v537 = vrot.slane %v536, 4
        %v538 = vadd.f32 %v536, %v537
        %v539 = vrot.slane %v538, 2
        %v540 = vadd.f32 %v538, %v539
        %v541 = vrot.slane %v540, 1
        %v542 = vadd.f32 %v540, %v541
        %s543 = vtos %v542
        %v544 = vstv %s543
        %v545 = vmul.f32 %v375, %v375
        %546 = vadd.xlane.f32.xlu0 %v545
        %v547 = vpop.xlane.xlu0 %546
        %v548 = vrot.slane %v547, 4
        %v549 = vadd.f32 %v547, %v548
        %v550 = vrot.slane %v549, 2
        %v551 = vadd.f32 %v549, %v550
        %v552 = vrot.slane %v551, 1
        %v553 = vadd.f32 %v551, %v552
        %s554 = vtos %v553
        %v555 = vstv %s554
        %v556 = vmul.f32 %v555, 0.01
        %v557 = vadd.f32 %v544, %v556
        %v558 = vadd.f32 %v527, %v557
        %vm559 = vcmask 0
        %560 = vst.msk [vmem:[#allocation3] sm:$0x1] %vm559, %v558
        %v561 = vpack.c.bf16 %v524, %v523
        %v562 = vpack.c.bf16 %v526, %v525
        %v563 = vld [vmem:[#allocation2] sm:$0xff]
        %v564 = vpack.c.bf16 %v375, %v375
        %565 = vmatprep.subr.bf16.mxu0 0
        %566 = vmatpush1.bf16.xpose.msra.mxu0 %v561
        %567 = vmatprep.subr.bf16.mxu0 0
        %568 = vmatpush1.bf16.xpose.msra.mxu0 %v562
        %569 = vmatprep.subr.bf16.mxu0 0
        %570 = vmatpush1.bf16.xpose.msra.mxu0 0
        %571 = vmatprep.subr.bf16.mxu0 0
        %572 = vmatpush1.bf16.xpose.msra.mxu0 0
        %573 = vmatprep.subr.bf16.mxu0 0
        %574 = vmatpush1.bf16.xpose.msra.mxu0 0
        %575 = vmatprep.subr.bf16.mxu0 0
        %576 = vmatpush1.bf16.xpose.msra.mxu0 0
        %577 = vmatprep.subr.bf16.mxu0 0
        %578 = vmatpush1.bf16.xpose.msra.mxu0 0
        %579 = vmatprep.subr.bf16.mxu0 0
        %580 = vmatpush1.bf16.xpose.msra.mxu0 0
        %581 = vmatprep.subr.bf16.mxu0 0
        %582 = vmatpush1.bf16.xpose.msra.mxu0 0
        %583 = vmatprep.subr.bf16.mxu0 0
        %584 = vmatpush1.bf16.xpose.msra.mxu0 0
        %585 = vmatprep.subr.bf16.mxu0 0
        %586 = vmatpush1.bf16.xpose.msra.mxu0 0
        %587 = vmatprep.subr.bf16.mxu0 0
        %588 = vmatpush1.bf16.xpose.msra.mxu0 0
        %589 = vmatprep.subr.bf16.mxu0 0
        %590 = vmatpush1.bf16.xpose.msra.mxu0 0
        %591 = vmatprep.subr.bf16.mxu0 0
        %592 = vmatpush1.bf16.xpose.msra.mxu0 0
        %593 = vmatprep.subr.bf16.mxu0 0
        %594 = vmatpush1.bf16.xpose.msra.mxu0 0
        %595 = vmatprep.subr.bf16.mxu0 0
        %596 = vmatpush1.bf16.xpose.msra.mxu0 0
        %597 = vmatprep.mubr.bf16.mxu0 0
        %598 = vmatmul.mubr.bf16.gmra.mrb[0].mxu0 %v564
        %v599 = vpop.f32.mrb[0].mxu0
        %v600 = vadd.f32 0.0, %v599
        %v601 = vpop.f32.mrb[0].mxu0
        %v602 = vpop.f32.mrb[0].mxu0
        %v603 = vpop.f32.mrb[0].mxu0
        %604 = vdwg.mxu0
        %v605 = vadd.f32 %v563, %v600
        %vm606 = vcmask 261120
        %607 = vst.msk [vmem:[#allocation2] sm:$0xff] %vm606, %v605
        %v608 = vpack.c.bf16 %v374, %v374
        %v610 = vsel %vm606, %v608, 0
        %612 = vmatprep.subr.bf16.mxu0 0
        %613 = vmatpush1.bf16.msra.mxu0 %v561
        %614 = vmatprep.subr.bf16.mxu0 0
        %615 = vmatpush1.bf16.msra.mxu0 %v562
        %616 = vmatprep.subr.bf16.mxu0 0
        %617 = vmatpush1.bf16.msra.mxu0 0
        %618 = vmatprep.subr.bf16.mxu0 0
        %619 = vmatpush1.bf16.msra.mxu0 0
        %620 = vmatprep.subr.bf16.mxu0 0
        %621 = vmatpush1.bf16.msra.mxu0 0
        %622 = vmatprep.subr.bf16.mxu0 0
        %623 = vmatpush1.bf16.msra.mxu0 0
        %624 = vmatprep.subr.bf16.mxu0 0
        %625 = vmatpush1.bf16.msra.mxu0 0
        %626 = vmatprep.subr.bf16.mxu0 0
        %627 = vmatpush1.bf16.msra.mxu0 0
        %628 = vmatprep.subr.bf16.mxu0 0
        %629 = vmatpush1.bf16.msra.mxu0 0
        %630 = vmatprep.subr.bf16.mxu0 0
        %631 = vmatpush1.bf16.msra.mxu0 0
        %632 = vmatprep.subr.bf16.mxu0 0
        %633 = vmatpush1.bf16.msra.mxu0 0
        %634 = vmatprep.subr.bf16.mxu0 0
        %635 = vmatpush1.bf16.msra.mxu0 0
        %636 = vmatprep.subr.bf16.mxu0 0
        %637 = vmatpush1.bf16.msra.mxu0 0
        %638 = vmatprep.subr.bf16.mxu0 0
        %639 = vmatpush1.bf16.msra.mxu0 0
        %640 = vmatprep.subr.bf16.mxu0 0
        %641 = vmatpush1.bf16.msra.mxu0 0
        %642 = vmatprep.subr.bf16.mxu0 0
        %643 = vmatpush1.bf16.msra.mxu0 0
        %644 = vmatprep.mubr.bf16.mxu0 0
        %645 = vmatmul.mubr.bf16.gmra.mrb[0].mxu0 %v610
        %v646 = vpop.f32.mrb[0].mxu0
        %v647 = vadd.f32 0.0, %v646
        %v648 = vpop.f32.mrb[0].mxu0
        %v649 = vpop.f32.mrb[0].mxu0
        %v650 = vpop.f32.mrb[0].mxu0
        %651 = vdwg.mxu0
        %v652 = vmul.f32 %v647, -2.0
        %v653 = vmul.f32 %v375, 0.02
        %v654 = vadd.f32 %v652, %v653
        %v655 = vld [vmem:[%s356] sm:$0xff]
        %v656 = vmul.f32 %v655, 0.8
        %v657 = vadd.f32 %v656, %v654
        %658 = vst [vmem:[%s364] sm:$0xff] %v657
        %v659 = vmul.f32 %v657, 0.001
        %v660 = vsub.f32 %v375, %v659
        %661 = vst [vmem:[%s360] sm:$0xff] %v660
        %p662 = scmp.eq.s32.totalorder %s22, 2
        // Predicated region
        $region45: #{closed_call.7} parent=39 // pred_check
          %p663 = pneg %p662
        $region46: #{closed_call.7} parent=39 // pred_check_branch
          %665 = sbr.rel (%p663) target = $region48
        $region47: #{closed_call.7} parent=39 // pred_region
          %v666 = vld [vmem:[#allocation2] sm:$0xff]
          %v667 = vmul.f32 %v666, -2.0
          %v668 = vmul.f32 %v374, 0.02
          %v669 = vadd.f32 %v667, %v668
          %v670 = vld [vmem:[%s2] sm:$0xff]
          %v671 = vmul.f32 %v670, 0.8
          %v672 = vadd.f32 %v671, %v669
          %673 = vst.msk [vmem:[%s7] sm:$0xff] %vm606, %v672
          %v674 = vmul.f32 %v672, 0.001
          %v675 = vsub.f32 %v374, %v674
          %676 = vst.msk [vmem:[%s6] sm:$0xff] %vm606, %v675
          %v677 = vld [vmem:[#allocation3] sm:$0x1]
          %v678 = vmul.f32 %v374, %v374
          %v679 = vsel %vm606, %v678, 0.0
          %680 = vadd.xlane.f32.xlu0 %v679
          %v681 = vpop.xlane.xlu0 %680
          %v682 = vrot.slane %v681, 4
          %v683 = vadd.f32 %v681, %v682
          %v684 = vrot.slane %v683, 2
          %v685 = vadd.f32 %v683, %v684
          %v686 = vrot.slane %v685, 1
          %v687 = vadd.f32 %v685, %v686
          %s688 = vtos %v687
          %v689 = vstv %s688
          %v690 = vmul.f32 %v689, 0.01
          %v691 = vadd.f32 %v677, %v690
          %692 = vst.msk [vmem:[#allocation4] sm:$0x1] %vm559, %v691
        $region48: #{closed_call.7} parent=39 // pred_fallthru
          _
        %p693 = scmp.lt.s32.totalorder %s22, 2
        %s694 = scalar_select %p693, %s22, 2
        %s695 = smul.addr %s694, 8
        %s696 = scalar_lea.vmem %s8, %s695
        %p697 = scmp.lt.s32.totalorder %s22, 2
        %s698 = scalar_select %p697, %s22, 2
        %s699 = smul.addr %s698, 8
        %s700 = scalar_lea.vmem %s9, %s699
        // Predicated region
        $region49: #{closed_call.7} parent=39 // pred_check
          %p701 = pneg %p155
        $region50: #{closed_call.7} parent=39 // pred_check_branch
          %703 = sbr.rel (%p701) target = $region52
        $region51: #{closed_call.7} parent=39 // pred_region
          %s705 = ssub.s32 16, 16
          %706 = vsyncadd [#allocation5], %s705
          %s708 = sshll.u32 [#allocation4], 4
          %s709 = int_to_ptr.vmem [resolvable:$true] %s708
          %711 = dma.vmem_to_hbm [thread:$0]  %s709, 16, %s5, [#allocation5]
        $region52: #{closed_call.7} parent=39 // pred_fallthru
          _
        // Predicated region
        $region53: #{closed_call.7} parent=39 // pred_check
          %p712 = pneg %p176
        $region54: #{closed_call.7} parent=39 // pred_check_branch
          %714 = sbr.rel (%p712) target = $region56
        $region55: #{closed_call.7} parent=39 // pred_region
          _
        $region56: #{closed_call.7} parent=39 // pred_fallthru
          _
        // Predicated region
        $region57: #{closed_call.7} parent=39 // pred_check
          %p715 = pneg %p197
        $region58: #{closed_call.7} parent=39 // pred_check_branch
          %717 = sbr.rel (%p715) target = $region60
        $region59: #{closed_call.7} parent=39 // pred_region
          _
        $region60: #{closed_call.7} parent=39 // pred_fallthru
          _
        // Predicated region
        $region61: #{closed_call.7} parent=39 // pred_check
          %p718 = pneg %p223
        $region62: #{closed_call.7} parent=39 // pred_check_branch
          %720 = sbr.rel (%p718) target = $region64
        $region63: #{closed_call.7} parent=39 // pred_region
          _
        $region64: #{closed_call.7} parent=39 // pred_fallthru
          _
        // Predicated region
        $region65: #{closed_call.7} parent=39 // pred_check
          %p721 = pneg %p249
        $region66: #{closed_call.7} parent=39 // pred_check_branch
          %723 = sbr.rel (%p721) target = $region68
        $region67: #{closed_call.7} parent=39 // pred_region
          _
        $region68: #{closed_call.7} parent=39 // pred_fallthru
          _
        // Predicated region
        $region69: #{closed_call.7} parent=39 // pred_check
          %p724 = pneg %p155
        $region70: #{closed_call.7} parent=39 // pred_check_branch
          %726 = sbr.rel (%p724) target = $region72
        $region71: #{closed_call.7} parent=39 // pred_region
          %727 = dma.done [#allocation5], 16
        $region72: #{closed_call.7} parent=39 // pred_fallthru
          _
        // Predicated region
        $region73: #{closed_call.7} parent=39 // pred_check
          %p728 = pneg %p176
        $region74: #{closed_call.7} parent=39 // pred_check_branch
          %730 = sbr.rel (%p728) target = $region76
        $region75: #{closed_call.7} parent=39 // pred_region
          _
        $region76: #{closed_call.7} parent=39 // pred_fallthru
          _
        // Predicated region
        $region77: #{closed_call.7} parent=39 // pred_check
          %p731 = pneg %p197
        $region78: #{closed_call.7} parent=39 // pred_check_branch
          %733 = sbr.rel (%p731) target = $region80
        $region79: #{closed_call.7} parent=39 // pred_region
          _
        $region80: #{closed_call.7} parent=39 // pred_fallthru
          _
      $region40: #{closed_call.7} parent=5 // pred_fallthru
        _
      %p734 = scmp.le.s32.totalorder 2, %s17
      // Predicated region
      $region81: #{closed_call.7} parent=5 // pred_check
        %p735 = pneg %p734
      $region82: #{closed_call.7} parent=5 // pred_check_branch
        %737 = sbr.rel (%p735) target = $region84
      $region83: #{closed_call.7} parent=5 // pred_region
        %s738 = ssub.s32 %s17, 2
        // Predicated region
        $region85: #{closed_call.7} parent=83 // pred_check
          %p739 = pneg %p229
        $region86: #{closed_call.7} parent=83 // pred_check_branch
          %741 = sbr.rel (%p739) target = $region88
        $region87: #{closed_call.7} parent=83 // pred_region
          %p742 = scmp.lt.s32.totalorder %s23, 2
          %s743 = scalar_select %p742, %s23, 2
          %s744 = smul.addr %s743, 8
          %s745 = scalar_lea.vmem %s8, %s744
        $region88: #{closed_call.7} parent=83 // pred_fallthru
          _
        // Predicated region
        $region89: #{closed_call.7} parent=83 // pred_check
          %p746 = pneg %p255
        $region90: #{closed_call.7} parent=83 // pred_check_branch
          %748 = sbr.rel (%p746) target = $region92
        $region91: #{closed_call.7} parent=83 // pred_region
          %p749 = scmp.lt.s32.totalorder %s23, 2
          %s750 = scalar_select %p749, %s23, 2
          %s751 = smul.addr %s750, 8
          %s752 = scalar_lea.vmem %s9, %s751
        $region92: #{closed_call.7} parent=83 // pred_fallthru
          _
      $region84: #{closed_call.7} parent=5 // pred_fallthru
        _
    $region6: #{closed_call.7} parent=1 // loop_footer
      %s21 = sadd.s32 1, %s17
    $region7: #{closed_call.7} parent=1 // loop_footer_branch
      %16 = sbr.rel target = $region3
    $region8: #{closed_call.7} parent=1 // loop_exit
      _
    %753 = vsyncpa [#allocation5], 1
    %s754 = scalar_lea.sflag [#allocation5], 1
    %755 = vsyncpa %s754, 1

</llo_original>
